<compile_context>
chip_gen: v6e
topology: v6e:2x2x1
jax: 0.10.0
libtpu: 0.0.40
codegen_flags: <defaults>
</compile_context>

<pallas_src>
import jax
import jax.numpy as jnp
import numpy as np
from jax import lax
from jax.experimental import pallas as pl
from jax.experimental.pallas import tpu as pltpu


def _qarepvgg_kernel(x_ref, t_ref, b_ref, o_ref):
    """One grid step over `nb` images.

    x_ref : (nb, H//2, 2*W*Cin)        input row-pairs, channels fastest
    t_ref : (2*W*Cin, 3*(2*W*Cout))    folded banded pair-conv weights
    b_ref : (1, 2*W*Cout)              folded bias, tiled over (row-in-pair, W)
    o_ref : (nb, H//2, 2*W*Cout)       output row-pairs (128-lane dense)
    """
    nb, hh, kdim = x_ref.shape
    pw = o_ref.shape[2]                 # 2 * W * Cout
    m = nb * hh

    # Single MXU matmul: each input row-pair against the banded folded
    # weights yields the same-pair and both cross-pair partial sums at once.
    a = x_ref[...].reshape(m, kdim)     # free reshape (sublane merge)
    u = jnp.dot(a, t_ref[...], preferred_element_type=jnp.float32)

    same = u[:, 0:pw]                   # pair r -> pair r
    down = u[:, pw:2 * pw]              # pair r -> pair r + 1
    up = u[:, 2 * pw:3 * pw]            # pair r -> pair r - 1

    # Cross-pair terms: one-sublane circular shifts on the XLU (pltpu.roll).
    # The H-halo rows — which coincide with the cross-image and wrap-around
    # rows of the flattened (nb*hh) axis — are zeroed with a VPU select.
    r_in_img = lax.broadcasted_iota(jnp.int32, (m, pw), 0) % hh
    down_sh = jnp.where(r_in_img == 0, 0.0,
                        pltpu.roll(down, shift=1, axis=0))
    up_sh = jnp.where(r_in_img == hh - 1, 0.0,
                      pltpu.roll(up, shift=m - 1, axis=0))   # == shift -1

    # Folded bias + ReLU, then one lane-dense (128-wide) full-block store.
    y = jnp.maximum(same + down_sh + up_sh + b_ref[...].astype(jnp.float32),
                    0.0)
    o_ref[...] = y.reshape(nb, hh, pw).astype(o_ref.dtype)


def _fold_bn(gamma, beta, mean, var, eps=1e-5):
    scale = gamma / jnp.sqrt(var + eps)
    return scale, beta - mean * scale


def _fold_block_weights(w3_oihw, w1_oihw, dense_bn, final_bn, eps=1e-5):
    """Fold conv3x3+BN, conv1x1, identity and the final BN into one 3x3
    kernel (HWIO: [dy, dx, ci, co]) and a per-channel bias (eval-mode BN)."""
    g_d, b_d, m_d, v_d = dense_bn
    g_f, b_f, m_f, v_f = final_bn
    cin = w3_oihw.shape[1]

    sd, bd = _fold_bn(g_d, b_d, m_d, v_d, eps)   # rbr_dense BatchNorm
    sf, bf = _fold_bn(g_f, b_f, m_f, v_f, eps)   # final self.bn

    w3_hwio = jnp.transpose(w3_oihw, (2, 3, 1, 0)).astype(jnp.float32)
    w1_io = jnp.transpose(w1_oihw[:, :, 0, 0], (1, 0)).astype(jnp.float32)

    weff = w3_hwio * (sd * sf)[None, None, None, :]
    weff = weff.at[1, 1, :, :].add(
        (w1_io + jnp.eye(cin, dtype=jnp.float32)) * sf[None, :])
    beff = sf * bd + bf
    return weff, beff


def _pair_matrix(weff, w):
    """(3,3,Cin,Cout) kernel -> (2*W*Cin, 3*(2*W*Cout)) banded matrix.

    Row index: s*(W*Cin) + x_in*Cin + ci   (s = row slot within the pair)
    Column groups (each 2*W*Cout wide, col = e*(W*Cout) + x_out*Cout + co):
      [0]: contribution of pair r to pair r     (dy = s - e + 1)
      [1]: contribution of pair r to pair r + 1 (only s=1, e=0, dy=0)
      [2]: contribution of pair r to pair r - 1 (only s=0, e=1, dy=2)
    Zeros inside the W band implement the 'same' padding along W, so no W
    halo is ever needed.
    """
    _, _, cin, cout = weff.shape

    shift = np.zeros((3, w, w), np.float32)          # shift[dx, x_in, x_out]
    for dx in range(3):
        for xo in range(w):
            xi = xo + dx - 1
            if 0 <= xi < w:
                shift[dx, xi, xo] = 1.0

    sel_same = np.zeros((2, 2, 3), np.float32)
    for s in range(2):
        for e in range(2):
            sel_same[s, e, s - e + 1] = 1.0
    sel_down = np.zeros((2, 2, 3), np.float32)
    sel_down[1, 0, 0] = 1.0
    sel_up = np.zeros((2, 2, 3), np.float32)
    sel_up[0, 1, 2] = 1.0

    shift_j = jnp.asarray(shift)

    def block(sel):
        t6 = jnp.einsum('sed,kpq,dkio->spieqo',
                        jnp.asarray(sel), shift_j, weff)
        return t6.reshape(2 * w * cin, 2 * w * cout)

    return jnp.concatenate([block(sel_same), block(sel_down), block(sel_up)],
                           axis=1)


def qarepvgg_forward(x_nchw, w3_oihw, w1_oihw, dense_bn, final_bn, *,
                     eps=1e-5, images_per_step=1,
                     matmul_dtype=jnp.float32):
    """QARepVGGBlock forward (deploy=False, BN with running statistics).

    x_nchw  : (N, C, H, W)            input, PyTorch NCHW convention
    w3_oihw : (C, C, 3, 3)            rbr_dense conv weight
    w1_oihw : (C, C, 1, 1)            rbr_1x1 conv weight
    dense_bn/final_bn: (gamma, beta, running_mean, running_var) tuples
    Returns (N, C, H, W).
    """
    n, cin, h, w = x_nchw.shape
    cout = w3_oihw.shape[0]
    assert cin == cout, "identity branch requires in_channels == out_channels"
    assert h % 2 == 0, "row-pair packing requires even H"  # TODO(synk): odd H

    nb = images_per_step
    assert n % nb == 0, "images_per_step must divide the batch"
    hh = h // 2
    kdim = 2 * w * cin
    pw = 2 * w * cout

    weff, beff = _fold_block_weights(w3_oihw, w1_oihw, dense_bn, final_bn, eps)
    tmat = _pair_matrix(weff, w).astype(matmul_dtype)        # (kdim, 3*pw)
    brow = jnp.tile(beff, 2 * w).reshape(1, pw).astype(jnp.float32)

    # NCHW -> NHWC -> (N, H/2, 2*W*Cin): channels-fastest row pairs.  In a
    # real network activations would stay in this layout between blocks and
    # the transposes below would disappear.
    x_rows = jnp.transpose(x_nchw, (0, 2, 3, 1)).reshape(n, hh, kdim)
    x_rows = x_rows.astype(matmul_dtype)

    out = pl.pallas_call(
        _qarepvgg_kernel,
        out_shape=jax.ShapeDtypeStruct((n, hh, pw), jnp.float32),
        grid_spec=pltpu.PrefetchScalarGridSpec(
            num_scalar_prefetch=0,
            grid=(n // nb,),
            in_specs=[
                pl.BlockSpec((nb, hh, kdim), lambda b: (b, 0, 0)),
                pl.BlockSpec((kdim, 3 * pw), lambda b: (0, 0)),
                pl.BlockSpec((1, pw), lambda b: (0, 0)),
            ],
            out_specs=pl.BlockSpec((nb, hh, pw), lambda b: (b, 0, 0)),
        ),
        compiler_params=pltpu.CompilerParams(
            dimension_semantics=("parallel",)),
    )(x_rows, tmat, brow)

    # (N, H/2, 2*W*Cout) -> NHWC is a free reshape; transpose back to NCHW to
    # match the PyTorch module's convention.
    return jnp.transpose(out.reshape(n, h, w, cout), (0, 3, 1, 2))


def ref_forward(x_nchw, w3_oihw, w1_oihw, dense_bn, final_bn, eps=1e-5):
    """Pure-JAX reference: same math as QARepVGGBlock.forward in eval mode."""
    g_d, b_d, m_d, v_d = dense_bn
    g_f, b_f, m_f, v_f = final_bn
    c = x_nchw.shape[1]
    dn = ("NCHW", "OIHW", "NCHW")
    y3 = lax.conv_general_dilated(x_nchw, w3_oihw, (1, 1), ((1, 1), (1, 1)),
                                  dimension_numbers=dn,
                                  precision=lax.Precision.HIGHEST)
    sd = g_d / jnp.sqrt(v_d + eps)
    dense = y3 * sd.reshape(1, c, 1, 1) + (b_d - m_d * sd).reshape(1, c, 1, 1)
    y1 = lax.conv_general_dilated(x_nchw, w1_oihw, (1, 1), ((0, 0), (0, 0)),
                                  dimension_numbers=dn,
                                  precision=lax.Precision.HIGHEST)
    s = dense + y1 + x_nchw
    sf = g_f / jnp.sqrt(v_f + eps)
    return jnp.maximum(s * sf.reshape(1, c, 1, 1)
                       + (b_f - m_f * sf).reshape(1, c, 1, 1), 0.0)


if __name__ == "__main__":
    # QARepVGGBlock(in_channels=4, out_channels=4, kernel_size=3, stride=1,
    #               padding=1, deploy=False), eval-mode BatchNorm.
    N, C, H, W = 2, 4, 16, 16
    key = jax.random.PRNGKey(0)
    ks = jax.random.split(key, 12)

    x_nchw = jax.random.normal(ks[0], (N, C, H, W), jnp.float32)

    # rbr_dense: Conv2d(C, C, 3, bias=False) + BatchNorm2d(C)
    w3_oihw = jax.random.normal(ks[1], (C, C, 3, 3), jnp.float32) * 0.1
    dense_bn = (1.0 + 0.1 * jax.random.normal(ks[2], (C,), jnp.float32),
                0.1 * jax.random.normal(ks[3], (C,), jnp.float32),
                0.1 * jax.random.normal(ks[4], (C,), jnp.float32),
                jnp.abs(jax.random.normal(ks[5], (C,), jnp.float32)) + 0.5)

    # rbr_1x1: Conv2d(C, C, 1, bias=False)  (no BN on this branch in QARepVGG)
    w1_oihw = jax.random.normal(ks[6], (C, C, 1, 1), jnp.float32) * 0.1

    # final self.bn = BatchNorm2d(C)
    final_bn = (1.0 + 0.1 * jax.random.normal(ks[7], (C,), jnp.float32),
                0.1 * jax.random.normal(ks[8], (C,), jnp.float32),
                0.1 * jax.random.normal(ks[9], (C,), jnp.float32),
                jnp.abs(jax.random.normal(ks[10], (C,), jnp.float32)) + 0.5)

    out = qarepvgg_forward(x_nchw, w3_oihw, w1_oihw, dense_bn, final_bn)
    out = jax.block_until_ready(out)

    ref = ref_forward(x_nchw, w3_oihw, w1_oihw, dense_bn, final_bn)
    assert out.shape == (N, C, H, W)
    max_err = float(jnp.max(jnp.abs(out - ref)))
    assert jnp.allclose(out, ref, atol=1e-3, rtol=1e-3), \
        f"mismatch vs JAX reference (max abs err {max_err})"

    print("KERNEL_OK")
</pallas_src>

<mosaic_0001>
module attributes {stable_mosaic.version = 11 : i64} {
  func.func @_qarepvgg_kernel(%arg0: i32, %arg1: memref<1x8x128xf32, #tpu.memory_space<vmem>>, %arg2: memref<128x384xf32, #tpu.memory_space<vmem>>, %arg3: memref<1x128xf32, #tpu.memory_space<vmem>>, %arg4: memref<1x8x128xf32, #tpu.memory_space<vmem>>) attributes {dimension_semantics = [#tpu.dimension_semantics<parallel>], iteration_bounds = array<i64: 2>, scalar_prefetch = 0 : i64, scratch_operands = 0 : i64, tpu.core_type = #tpu.core_type<tc>, window_params = [{transform_indices = @transform_0, window_bounds = array<i64: 1, 8, 128>}, {pipeline_mode = #tpu.pipeline_mode<synchronous>, transform_indices = @transform_1, window_bounds = array<i64: 128, 384>}, {pipeline_mode = #tpu.pipeline_mode<synchronous>, transform_indices = @transform_2, window_bounds = array<i64: 1, 128>}, {transform_indices = @transform_3, window_bounds = array<i64: 1, 8, 128>}]} {
    %c0 = arith.constant 0 : index
    %c0_0 = arith.constant 0 : index
    %c0_1 = arith.constant 0 : index
    %0 = vector.load %arg1[%c0, %c0_0, %c0_1] : memref<1x8x128xf32, #tpu.memory_space<vmem>>, vector<1x8x128xf32>
    %1 = vector.shape_cast %0 : vector<1x8x128xf32> to vector<8x128xf32>
    %c0_2 = arith.constant 0 : index
    %c0_3 = arith.constant 0 : index
    %2 = vector.load %arg2[%c0_2, %c0_3] : memref<128x384xf32, #tpu.memory_space<vmem>>, vector<128x384xf32>
    %cst = arith.constant dense<0.000000e+00> : vector<8x384xf32>
    %3 = tpu.matmul %1, %2, %cst {dimension_numbers = #tpu.dot_dimension_numbers<[1], [0], [0], [1], [0, 0, 1, 1], [], []>} : vector<8x128xf32>, vector<128x384xf32>, vector<8x384xf32> -> vector<8x384xf32>
    %4 = vector.extract_strided_slice %3 {offsets = [0, 0], sizes = [8, 128], strides = [1, 1]} : vector<8x384xf32> to vector<8x128xf32>
    %5 = vector.extract_strided_slice %3 {offsets = [0, 128], sizes = [8, 128], strides = [1, 1]} : vector<8x384xf32> to vector<8x128xf32>
    %6 = vector.extract_strided_slice %3 {offsets = [0, 256], sizes = [8, 128], strides = [1, 1]} : vector<8x384xf32> to vector<8x128xf32>
    %7 = tpu.iota {dimensions = array<i32: 0>} : vector<8x128xi32>
    %c8_i32 = arith.constant 8 : i32
    %c0_i32 = arith.constant 0 : i32
    %8 = arith.cmpi eq, %c8_i32, %c0_i32 : i32
    %c1_i32 = arith.constant 1 : i32
    %9 = arith.select %8, %c1_i32, %c8_i32 : i32
    %10 = vector.broadcast %9 : i32 to vector<8x128xi32>
    %11 = arith.remsi %7, %10 : vector<8x128xi32>
    %c0_i32_4 = arith.constant 0 : i32
    %12 = vector.broadcast %c0_i32_4 : i32 to vector<8x128xi32>
    %13 = arith.cmpi ne, %11, %12 : vector<8x128xi32>
    %c0_i32_5 = arith.constant 0 : i32
    %14 = vector.broadcast %c0_i32_5 : i32 to vector<8x128xi32>
    %15 = arith.cmpi slt, %11, %14 : vector<8x128xi32>
    %c0_i32_6 = arith.constant 0 : i32
    %16 = arith.cmpi slt, %9, %c0_i32_6 : i32
    %17 = vector.broadcast %16 : i1 to vector<8x128xi1>
    %18 = vector.broadcast %17 : vector<8x128xi1> to vector<8x128xi1>
    %19 = arith.xori %15, %18 : vector<8x128xi1>
    %20 = arith.andi %19, %13 : vector<8x128xi1>
    %21 = vector.broadcast %9 : i32 to vector<8x128xi32>
    %22 = arith.addi %11, %21 : vector<8x128xi32>
    %23 = arith.select %20, %22, %11 : vector<8x128xi1>, vector<8x128xi32>
    %c0_i32_7 = arith.constant 0 : i32
    %24 = vector.broadcast %c0_i32_7 : i32 to vector<8x128xi32>
    %25 = arith.cmpi eq, %23, %24 : vector<8x128xi32>
    %c1_i32_8 = arith.constant 1 : i32
    %26 = tpu.dynamic_rotate %5 by %c1_i32_8 dim 0 : vector<8x128xf32>, i32 -> vector<8x128xf32>
    %cst_9 = arith.constant 0.000000e+00 : f32
    %27 = vector.broadcast %cst_9 : f32 to vector<8x128xf32>
    %28 = arith.select %25, %27, %26 : vector<8x128xi1>, vector<8x128xf32>
    %c7_i32 = arith.constant 7 : i32
    %29 = vector.broadcast %c7_i32 : i32 to vector<8x128xi32>
    %30 = arith.cmpi eq, %23, %29 : vector<8x128xi32>
    %c7_i32_10 = arith.constant 7 : i32
    %31 = tpu.dynamic_rotate %6 by %c7_i32_10 dim 0 : vector<8x128xf32>, i32 -> vector<8x128xf32>
    %cst_11 = arith.constant 0.000000e+00 : f32
    %32 = vector.broadcast %cst_11 : f32 to vector<8x128xf32>
    %33 = arith.select %30, %32, %31 : vector<8x128xi1>, vector<8x128xf32>
    %34 = arith.addf %4, %28 : vector<8x128xf32>
    %35 = arith.addf %34, %33 : vector<8x128xf32>
    %c0_12 = arith.constant 0 : index
    %c0_13 = arith.constant 0 : index
    %36 = vector.load %arg3[%c0_12, %c0_13] : memref<1x128xf32, #tpu.memory_space<vmem>>, vector<1x128xf32>
    %37 = vector.broadcast %36 : vector<1x128xf32> to vector<8x128xf32>
    %38 = arith.addf %35, %37 : vector<8x128xf32>
    %cst_14 = arith.constant 0.000000e+00 : f32
    %39 = vector.broadcast %cst_14 : f32 to vector<8x128xf32>
    %40 = arith.maximumf %38, %39 : vector<8x128xf32>
    %41 = vector.shape_cast %40 : vector<8x128xf32> to vector<1x8x128xf32>
    %c0_15 = arith.constant 0 : index
    %c0_16 = arith.constant 0 : index
    %c0_17 = arith.constant 0 : index
    %42 = vector.load %arg4[%c0_15, %c0_16, %c0_17] : memref<1x8x128xf32, #tpu.memory_space<vmem>>, vector<1x8x128xf32>
    tpu.vector_store %arg4[%c0_15, %c0_16, %c0_17], %41 {strides = array<i32>} : memref<1x8x128xf32, #tpu.memory_space<vmem>>, vector<1x8x128xf32>,
    return
  }
  func.func @transform_0(%arg0: i32) -> (i32, i32, i32) {
    %c0_i32 = arith.constant 0 : i32
    %c0_i32_0 = arith.constant 0 : i32
    %c0_i32_1 = arith.constant 0 : i32
    return %arg0, %c0_i32, %c0_i32_0 : i32, i32, i32
  }
  func.func @transform_1(%arg0: i32) -> (i32, i32) {
    %c0_i32 = arith.constant 0 : i32
    %c0_i32_0 = arith.constant 0 : i32
    %c0_i32_1 = arith.constant 0 : i32
    return %c0_i32, %c0_i32_0 : i32, i32
  }
  func.func @transform_2(%arg0: i32) -> (i32, i32) {
    %c0_i32 = arith.constant 0 : i32
    %c0_i32_0 = arith.constant 0 : i32
    %c0_i32_1 = arith.constant 0 : i32
    return %c0_i32, %c0_i32_0 : i32, i32
  }
  func.func @transform_3(%arg0: i32) -> (i32, i32, i32) {
    %c0_i32 = arith.constant 0 : i32
    %c0_i32_0 = arith.constant 0 : i32
    %c0_i32_1 = arith.constant 0 : i32
    return %arg0, %c0_i32, %c0_i32_0 : i32, i32, i32
  }
}

</mosaic_0001>

<llo_original>
// kernel: tpu_custom_call.1
$region0: #{tpu_custom_call.1}
  #allocation0 [shape = 'u32[]', space=smem, size = 0x4, offset = 0x4, fixed_abs, tag = 'smem constant byte address 0x4 - core index']
  #allocation1 [shape = 'u32[144,128]{1,0:T(1,128)}', space=vmem, size = 0x12000, scoped, tag = 'internal scratch']
  %s0 = inlined_call_operand.hbm [shape: f32[2,8,128], index: 0, kind: input, shape index: {}]
  %s1 = inlined_call_operand.hbm [shape: f32[128,384], index: 1, kind: input, shape index: {}]
  %s2 = inlined_call_operand.vmem [shape: f32[1,128], index: 2, kind: input, shape index: {}]
  %s3 = inlined_call_operand.hbm [shape: f32[2,8,128], index: 3, kind: output, shape index: {}]
  %s4 = sld [smem:[#allocation0]]
  $region53: #{tpu_custom_call.1} parent=0
    _
  %s6 = ssub.s32 1, %s4
  %s7 = scalar_select 0, %s6, %s4
  $region1: #{tpu_custom_call.1} parent=0
    #allocation2 [shape = 'u8[8192]{0}', space=vmem, size = 0x2000, scoped, tag = 'input window, operand 0']
    #allocation3 [shape = 's32[2]{0}', space=sflag, size = 0x8, scoped, tag = 'scoped memory for tpu_custom_call.1']
    #allocation4 [shape = 's32[2]{0}', space=sflag, size = 0x8, scoped, tag = 'scoped memory for tpu_custom_call.1']
    #allocation5 [shape = 'u8[196608]{0}', space=vmem, size = 0x30000, scoped, tag = 'input window, operand 1, single buffered']
    #allocation6 [shape = 's32[1]{0}', space=sflag, size = 0x4, scoped, tag = 'scoped memory for tpu_custom_call.1']
    #allocation7 [shape = 'u8[8192]{0}', space=vmem, size = 0x2000, scoped, tag = 'output window, operand 0']
    %8 = vsyncpa [#allocation3], 0
    %s9 = scalar_lea.sflag [#allocation3], 1
    %10 = vsyncpa %s9, 0
    %11 = vsyncpa [#allocation6], 0
    %12 = vsyncpa [#allocation4], 0
    %s13 = scalar_lea.sflag [#allocation4], 1
    %14 = vsyncpa %s13, 0
    loop: start=0, step=1, limit=4
    $region2: #{tpu_custom_call.1} parent=1 // loop_pre_header
      _
    $region3: #{tpu_custom_call.1} parent=1 // loop_header
      %s16 = sphi 0, %s20
      %p17 = scmp.ge.s32.totalorder %s16, 4
      %s26 = sphi 0, %s28
      %s29 = sphi 0, %s26
      %s30 = sphi 0, %s29
      %s46 = sphi 0, %s30
      %s50 = sphi 0, %s50
      %s52 = sphi 0, %s50
      %s53 = sphi 0, %s52
      %s67 = sphi 0, %s53
      %s71 = sphi 0, %s71
      %s73 = sphi 0, %s71
      %s74 = sphi 0, %s73
      %s88 = sphi 0, %s74
      %s94 = sphi 0, %s96
      %s97 = sphi 0, %s94
      %s98 = sphi 0, %s97
      %s114 = sphi 0, %s98
    $region4: #{tpu_custom_call.1} parent=1 // loop_header_branch
      %19 = sbr.rel (%p17) target = $region8
    $region5: #{tpu_custom_call.1} parent=1 // loop_body
      %s21 = ssub.s32 %s16, 1
      %s22 = ssub.s32 %s16, 2
      %s23 = sadd.s32 %s16, 1
      %s24 = ssub.s32 %s16, %s23
      %p25 = scmp.eq.s32.totalorder %s24, 0
      %s27 = sadd.s32 %s26, 1
      %s28 = scalar_select %p25, %s26, %s27
      %p31 = pneg %p25
      %p32 = scmp.eq.s32.totalorder %s16, 1
      %p33 = por %p31, %p32
      %p34 = scmp.ne.s32.totalorder %s26, %s29
      %p35 = scmp.eq.s32.totalorder %s16, 0
      %p36 = por %p34, %p35
      %p37 = scmp.ne.s32.totalorder %s26, %s29
      %p38 = scmp.eq.s32.totalorder %s21, 1
      %p39 = por %p37, %p38
      %p40 = scmp.ne.s32.totalorder %s29, %s30
      %p41 = scmp.eq.s32.totalorder %s21, 0
      %p42 = por %p40, %p41
      %p43 = scmp.ne.s32.totalorder %s29, %s30
      %p44 = scmp.eq.s32.totalorder %s22, 1
      %p45 = por %p43, %p44
      %p47 = scmp.ne.s32.totalorder %s30, %s46
      %p48 = scmp.eq.s32.totalorder %s22, 0
      %p49 = por %p47, %p48
      %s51 = sadd.s32 %s50, 1
      %p54 = scmp.eq.s32.totalorder %s16, 1
      %p55 = scmp.ne.s32.totalorder %s50, %s52
      %p56 = scmp.eq.s32.totalorder %s16, 0
      %p57 = por %p55, %p56
      %p58 = scmp.ne.s32.totalorder %s50, %s52
      %p59 = scmp.eq.s32.totalorder %s21, 1
      %p60 = por %p58, %p59
      %p61 = scmp.ne.s32.totalorder %s52, %s53
      %p62 = scmp.eq.s32.totalorder %s21, 0
      %p63 = por %p61, %p62
      %p64 = scmp.ne.s32.totalorder %s52, %s53
      %p65 = scmp.eq.s32.totalorder %s22, 1
      %p66 = por %p64, %p65
      %p68 = scmp.ne.s32.totalorder %s53, %s67
      %p69 = scmp.eq.s32.totalorder %s22, 0
      %p70 = por %p68, %p69
      %s72 = sadd.s32 %s71, 1
      %p75 = scmp.eq.s32.totalorder %s16, 1
      %p76 = scmp.ne.s32.totalorder %s71, %s73
      %p77 = scmp.eq.s32.totalorder %s16, 0
      %p78 = por %p76, %p77
      %p79 = scmp.ne.s32.totalorder %s71, %s73
      %p80 = scmp.eq.s32.totalorder %s21, 1
      %p81 = por %p79, %p80
      %p82 = scmp.ne.s32.totalorder %s73, %s74
      %p83 = scmp.eq.s32.totalorder %s21, 0
      %p84 = por %p82, %p83
      %p85 = scmp.ne.s32.totalorder %s73, %s74
      %p86 = scmp.eq.s32.totalorder %s22, 1
      %p87 = por %p85, %p86
      %p89 = scmp.ne.s32.totalorder %s74, %s88
      %p90 = scmp.eq.s32.totalorder %s22, 0
      %p91 = por %p89, %p90
      %s92 = ssub.s32 %s16, %s23
      %p93 = scmp.eq.s32.totalorder %s92, 0
      %s95 = sadd.s32 %s94, 1
      %s96 = scalar_select %p93, %s94, %s95
      %p99 = pneg %p93
      %p100 = scmp.eq.s32.totalorder %s16, 1
      %p101 = por %p99, %p100
      %p102 = scmp.ne.s32.totalorder %s94, %s97
      %p103 = scmp.eq.s32.totalorder %s16, 0
      %p104 = por %p102, %p103
      %p105 = scmp.ne.s32.totalorder %s94, %s97
      %p106 = scmp.eq.s32.totalorder %s21, 1
      %p107 = por %p105, %p106
      %p108 = scmp.ne.s32.totalorder %s97, %s98
      %p109 = scmp.eq.s32.totalorder %s21, 0
      %p110 = por %p108, %p109
      %p111 = scmp.ne.s32.totalorder %s97, %s98
      %p112 = scmp.eq.s32.totalorder %s22, 1
      %p113 = por %p111, %p112
      %p115 = scmp.ne.s32.totalorder %s98, %s114
      %p116 = scmp.eq.s32.totalorder %s22, 0
      %p117 = por %p115, %p116
      %p118 = scmp.le.s32.totalorder 1, %s16
      %p119 = scmp.lt.s32.totalorder %s16, 3
      %p120 = pnand %p118, %p119
      %p121 = pneg %p120
      // Predicated region
      $region9: #{tpu_custom_call.1} parent=5 // pred_check
        _
      $region10: #{tpu_custom_call.1} parent=5 // pred_check_branch
        %123 = sbr.rel (%p120) target = $region12
      $region11: #{tpu_custom_call.1} parent=5 // pred_region
        %s124 = ssub.s32 %s16, 1
        // Predicated region
        $region13: #{tpu_custom_call.1} parent=11 // pred_check
          %p125 = pneg %p63
        $region14: #{tpu_custom_call.1} parent=11 // pred_check_branch
          %127 = sbr.rel (%p125) target = $region16
        $region15: #{tpu_custom_call.1} parent=11 // pred_region
          %s129 = ssub.s32 6144, 6144
          %130 = vsyncadd [#allocation6], %s129
          %s131 = sshll.u32 [#allocation5], 4
          %s132 = int_to_ptr.vmem [resolvable:$true] %s131
          %137 = dma.hbm_to_vmem [thread:$0]  %s1, 6144, %s132, [#allocation6], 384, 384, 24
        $region16: #{tpu_custom_call.1} parent=11 // pred_fallthru
          _
        // Predicated region
        $region17: #{tpu_custom_call.1} parent=11 // pred_check
          %p138 = pneg %p84
        $region18: #{tpu_custom_call.1} parent=11 // pred_check_branch
          %140 = sbr.rel (%p138) target = $region20
        $region19: #{tpu_custom_call.1} parent=11 // pred_region
          _
        $region20: #{tpu_custom_call.1} parent=11 // pred_fallthru
          _
      $region12: #{tpu_custom_call.1} parent=5 // pred_fallthru
        _
      %p141 = scmp.lt.s32.totalorder %s16, 2
      // Predicated region
      $region21: #{tpu_custom_call.1} parent=5 // pred_check
        %p142 = pneg %p141
      $region22: #{tpu_custom_call.1} parent=5 // pred_check_branch
        %144 = sbr.rel (%p142) target = $region24
      $region23: #{tpu_custom_call.1} parent=5 // pred_region
        // Predicated region
        $region25: #{tpu_custom_call.1} parent=23 // pred_check
          %p145 = pneg %p36
        $region26: #{tpu_custom_call.1} parent=23 // pred_check_branch
          %147 = sbr.rel (%p145) target = $region28
        $region27: #{tpu_custom_call.1} parent=23 // pred_region
          %s148 = sand.u32 %s26, 1
          %s149 = scalar_lea.sflag [#allocation3], %s148
          %s150 = sand.u32 %s26, 1
          %s151 = smul.addr %s150, 8
          %s152 = scalar_lea.vmem [#allocation2], %s151
          %s154 = ssub.s32 128, 128
          %155 = vsyncadd %s149, %s154
          %s156 = smul.addr %s16, 128
          %s157 = scalar_lea.hbm %s0, %s156
          %s159 = sshll.u32 %s152, 4
          %s160 = int_to_ptr.vmem [resolvable:$true] %s159
          %162 = dma.hbm_to_vmem [thread:$0]  %s157, 128, %s160, %s149
        $region28: #{tpu_custom_call.1} parent=23 // pred_fallthru
          _
      $region24: #{tpu_custom_call.1} parent=5 // pred_fallthru
        _
      %p163 = scmp.le.s32.totalorder 1, %s16
      %p164 = scmp.lt.s32.totalorder %s16, 3
      %p165 = pnand %p163, %p164
      %p166 = pneg %p165
      // Predicated region
      $region29: #{tpu_custom_call.1} parent=5 // pred_check
        _
      $region30: #{tpu_custom_call.1} parent=5 // pred_check_branch
        %168 = sbr.rel (%p165) target = $region32
      $region31: #{tpu_custom_call.1} parent=5 // pred_region
        %s169 = ssub.s32 %s16, 1
        %s170 = sand.u32 %s29, 1
        %s171 = scalar_lea.sflag [#allocation3], %s170
        %s172 = sand.u32 %s29, 1
        %s173 = smul.addr %s172, 8
        %s174 = scalar_lea.vmem [#allocation2], %s173
        // Predicated region
        $region33: #{tpu_custom_call.1} parent=31 // pred_check
          %p175 = pneg %p42
        $region34: #{tpu_custom_call.1} parent=31 // pred_check_branch
          %177 = sbr.rel (%p175) target = $region36
        $region35: #{tpu_custom_call.1} parent=31 // pred_region
          %178 = dma.done %s171, 128
        $region36: #{tpu_custom_call.1} parent=31 // pred_fallthru
          _
        // Predicated region
        $region37: #{tpu_custom_call.1} parent=31 // pred_check
          %p179 = pneg %p63
        $region38: #{tpu_custom_call.1} parent=31 // pred_check_branch
          %181 = sbr.rel (%p179) target = $region40
        $region39: #{tpu_custom_call.1} parent=31 // pred_region
          %182 = dma.done [#allocation6], 6144
        $region40: #{tpu_custom_call.1} parent=31 // pred_fallthru
          _
        %s183 = sand.u32 %s29, 1
        %s184 = scalar_lea.sflag [#allocation3], %s183
        %s185 = sand.u32 %s29, 1
        %s186 = smul.addr %s185, 8
        %s187 = scalar_lea.vmem [#allocation2], %s186
        %p188 = pneg %p42
        %p189 = pneg %p39
        %p190 = pneg %p63
        %p191 = pneg %p60
        %p192 = pneg %p84
        %p193 = pneg %p81
        %p194 = pneg %p110
        %p195 = pneg %p107
        %s196 = sand.u32 %s97, 1
        %s197 = scalar_lea.sflag [#allocation4], %s196
        %s198 = sand.u32 %s97, 1
        %s199 = smul.addr %s198, 8
        %s200 = scalar_lea.vmem [#allocation7], %s199
        %v201 = vld [vmem:[%s174] sm:$0xff]
        %v202 = vld [vmem:[#allocation5] sm:$0xff]
        %v203 = vld [vmem:[#allocation5 + $0x8] sm:$0xff]
        %v204 = vld [vmem:[#allocation5 + $0x10] sm:$0xff]
        %v205 = vld [vmem:[#allocation5 + $0x18] sm:$0xff]
        %v206 = vld [vmem:[#allocation5 + $0x20] sm:$0xff]
        %v207 = vld [vmem:[#allocation5 + $0x28] sm:$0xff]
        %v208 = vld [vmem:[#allocation5 + $0x30] sm:$0xff]
        %v209 = vld [vmem:[#allocation5 + $0x38] sm:$0xff]
        %v210 = vld [vmem:[#allocation5 + $0x40] sm:$0xff]
        %v211 = vld [vmem:[#allocation5 + $0x48] sm:$0xff]
        %v212 = vld [vmem:[#allocation5 + $0x50] sm:$0xff]
        %v213 = vld [vmem:[#allocation5 + $0x58] sm:$0xff]
        %v214 = vld [vmem:[#allocation5 + $0x60] sm:$0xff]
        %v215 = vld [vmem:[#allocation5 + $0x68] sm:$0xff]
        %v216 = vld [vmem:[#allocation5 + $0x70] sm:$0xff]
        %v217 = vld [vmem:[#allocation5 + $0x78] sm:$0xff]
        %v218 = vld [vmem:[#allocation5 + $0x80] sm:$0xff]
        %v219 = vld [vmem:[#allocation5 + $0x88] sm:$0xff]
        %v220 = vld [vmem:[#allocation5 + $0x90] sm:$0xff]
        %v221 = vld [vmem:[#allocation5 + $0x98] sm:$0xff]
        %v222 = vld [vmem:[#allocation5 + $0xa0] sm:$0xff]
        %v223 = vld [vmem:[#allocation5 + $0xa8] sm:$0xff]
        %v224 = vld [vmem:[#allocation5 + $0xb0] sm:$0xff]
        %v225 = vld [vmem:[#allocation5 + $0xb8] sm:$0xff]
        %v226 = vld [vmem:[#allocation5 + $0xc0] sm:$0xff]
        %v227 = vld [vmem:[#allocation5 + $0xc8] sm:$0xff]
        %v228 = vld [vmem:[#allocation5 + $0xd0] sm:$0xff]
        %v229 = vld [vmem:[#allocation5 + $0xd8] sm:$0xff]
        %v230 = vld [vmem:[#allocation5 + $0xe0] sm:$0xff]
        %v231 = vld [vmem:[#allocation5 + $0xe8] sm:$0xff]
        %v232 = vld [vmem:[#allocation5 + $0xf0] sm:$0xff]
        %v233 = vld [vmem:[#allocation5 + $0xf8] sm:$0xff]
        %v234 = vld [vmem:[#allocation5 + $0x100] sm:$0xff]
        %v235 = vld [vmem:[#allocation5 + $0x108] sm:$0xff]
        %v236 = vld [vmem:[#allocation5 + $0x110] sm:$0xff]
        %v237 = vld [vmem:[#allocation5 + $0x118] sm:$0xff]
        %v238 = vld [vmem:[#allocation5 + $0x120] sm:$0xff]
        %v239 = vld [vmem:[#allocation5 + $0x128] sm:$0xff]
        %v240 = vld [vmem:[#allocation5 + $0x130] sm:$0xff]
        %v241 = vld [vmem:[#allocation5 + $0x138] sm:$0xff]
        %v242 = vld [vmem:[#allocation5 + $0x140] sm:$0xff]
        %v243 = vld [vmem:[#allocation5 + $0x148] sm:$0xff]
        %v244 = vld [vmem:[#allocation5 + $0x150] sm:$0xff]
        %v245 = vld [vmem:[#allocation5 + $0x158] sm:$0xff]
        %v246 = vld [vmem:[#allocation5 + $0x160] sm:$0xff]
        %v247 = vld [vmem:[#allocation5 + $0x168] sm:$0xff]
        %v248 = vld [vmem:[#allocation5 + $0x170] sm:$0xff]
        %v249 = vld [vmem:[#allocation5 + $0x178] sm:$0xff]
        %250 = vmatprep.subr.mxu0 %v248
        %251 = vmatpush1.msra.mxu0 %v247
        %252 = vmatprep.subr.mxu0 %v245
        %253 = vmatpush1.msra.mxu0 %v244
        %254 = vmatprep.subr.mxu0 %v242
        %255 = vmatpush1.msra.mxu0 %v241
        %256 = vmatprep.subr.mxu0 %v239
        %257 = vmatpush1.msra.mxu0 %v238
        %258 = vmatprep.subr.mxu0 %v236
        %259 = vmatpush1.msra.mxu0 %v235
        %260 = vmatprep.subr.mxu0 %v233
        %261 = vmatpush1.msra.mxu0 %v232
        %262 = vmatprep.subr.mxu0 %v230
        %263 = vmatpush1.msra.mxu0 %v229
        %264 = vmatprep.subr.mxu0 %v227
        %265 = vmatpush1.msra.mxu0 %v226
        %266 = vmatprep.subr.mxu0 %v224
        %267 = vmatpush1.msra.mxu0 %v223
        %268 = vmatprep.subr.mxu0 %v221
        %269 = vmatpush1.msra.mxu0 %v220
        %270 = vmatprep.subr.mxu0 %v218
        %271 = vmatpush1.msra.mxu0 %v217
        %272 = vmatprep.subr.mxu0 %v215
        %273 = vmatpush1.msra.mxu0 %v214
        %274 = vmatprep.subr.mxu0 %v212
        %275 = vmatpush1.msra.mxu0 %v211
        %276 = vmatprep.subr.mxu0 %v209
        %277 = vmatpush1.msra.mxu0 %v208
        %278 = vmatprep.subr.mxu0 %v206
        %279 = vmatpush1.msra.mxu0 %v205
        %280 = vmatprep.subr.mxu0 %v203
        %281 = vmatpush1.msra.mxu0 %v202
        %282 = vmatprep.subr.mxu0 0.0
        %283 = vmatpush2.msra.mxu0 0.0
        %284 = vmatprep.subr.mxu0 0.0
        %285 = vmatpush2.msra.mxu0 0.0
        %286 = vmatprep.subr.mxu0 0.0
        %287 = vmatpush2.msra.mxu0 0.0
        %288 = vmatprep.subr.mxu0 0.0
        %289 = vmatpush2.msra.mxu0 0.0
        %290 = vmatprep.subr.mxu0 0.0
        %291 = vmatpush2.msra.mxu0 0.0
        %292 = vmatprep.subr.mxu0 0.0
        %293 = vmatpush2.msra.mxu0 0.0
        %294 = vmatprep.subr.mxu0 0.0
        %295 = vmatpush2.msra.mxu0 0.0
        %296 = vmatprep.subr.mxu0 0.0
        %297 = vmatpush2.msra.mxu0 0.0
        %298 = vmatprep.subr.mxu0 0.0
        %299 = vmatpush2.msra.mxu0 0.0
        %300 = vmatprep.subr.mxu0 0.0
        %301 = vmatpush2.msra.mxu0 0.0
        %302 = vmatprep.subr.mxu0 0.0
        %303 = vmatpush2.msra.mxu0 0.0
        %304 = vmatprep.subr.mxu0 0.0
        %305 = vmatpush2.msra.mxu0 0.0
        %306 = vmatprep.subr.mxu0 0.0
        %307 = vmatpush2.msra.mxu0 0.0
        %308 = vmatprep.subr.mxu0 0.0
        %309 = vmatpush2.msra.mxu0 0.0
        %310 = vmatprep.subr.mxu0 0.0
        %311 = vmatpush2.msra.mxu0 0.0
        %312 = vmatprep.subr.mxu0 0.0
        %313 = vmatpush2.msra.mxu0 0.0
        %314 = vmatprep.mubr.f32.mxu0 0.0
        %315 = vmatmul.mubr.f32.gmra.mxu0 %v201
        %v316 = vpop.f32.mrf.mxu0
        %v317 = vadd.f32 0.0, %v316
        %v318 = vpop.f32.mrf.mxu0
        %v319 = vadd.f32 0.0, %v318
        %320 = vdwg.mxu0
        %321 = vmatprep.subr.mxu0 0.0
        %322 = vmatpush1.msra.mxu0 %v249
        %323 = vmatprep.subr.mxu0 0.0
        %324 = vmatpush1.msra.mxu0 %v246
        %325 = vmatprep.subr.mxu0 0.0
        %326 = vmatpush1.msra.mxu0 %v243
        %327 = vmatprep.subr.mxu0 0.0
        %328 = vmatpush1.msra.mxu0 %v240
        %329 = vmatprep.subr.mxu0 0.0
        %330 = vmatpush1.msra.mxu0 %v237
        %331 = vmatprep.subr.mxu0 0.0
        %332 = vmatpush1.msra.mxu0 %v234
        %333 = vmatprep.subr.mxu0 0.0
        %334 = vmatpush1.msra.mxu0 %v231
        %335 = vmatprep.subr.mxu0 0.0
        %336 = vmatpush1.msra.mxu0 %v228
        %337 = vmatprep.subr.mxu0 0.0
        %338 = vmatpush1.msra.mxu0 %v225
        %339 = vmatprep.subr.mxu0 0.0
        %340 = vmatpush1.msra.mxu0 %v222
        %341 = vmatprep.subr.mxu0 0.0
        %342 = vmatpush1.msra.mxu0 %v219
        %343 = vmatprep.subr.mxu0 0.0
        %344 = vmatpush1.msra.mxu0 %v216
        %345 = vmatprep.subr.mxu0 0.0
        %346 = vmatpush1.msra.mxu0 %v213
        %347 = vmatprep.subr.mxu0 0.0
        %348 = vmatpush1.msra.mxu0 %v210
        %349 = vmatprep.subr.mxu0 0.0
        %350 = vmatpush1.msra.mxu0 %v207
        %351 = vmatprep.subr.mxu0 0.0
        %352 = vmatpush1.msra.mxu0 %v204
        %353 = vmatprep.subr.mxu0 0.0
        %354 = vmatpush2.msra.mxu0 0.0
        %355 = vmatprep.subr.mxu0 0.0
        %356 = vmatpush2.msra.mxu0 0.0
        %357 = vmatprep.subr.mxu0 0.0
        %358 = vmatpush2.msra.mxu0 0.0
        %359 = vmatprep.subr.mxu0 0.0
        %360 = vmatpush2.msra.mxu0 0.0
        %361 = vmatprep.subr.mxu0 0.0
        %362 = vmatpush2.msra.mxu0 0.0
        %363 = vmatprep.subr.mxu0 0.0
        %364 = vmatpush2.msra.mxu0 0.0
        %365 = vmatprep.subr.mxu0 0.0
        %366 = vmatpush2.msra.mxu0 0.0
        %367 = vmatprep.subr.mxu0 0.0
        %368 = vmatpush2.msra.mxu0 0.0
        %369 = vmatprep.subr.mxu0 0.0
        %370 = vmatpush2.msra.mxu0 0.0
        %371 = vmatprep.subr.mxu0 0.0
        %372 = vmatpush2.msra.mxu0 0.0
        %373 = vmatprep.subr.mxu0 0.0
        %374 = vmatpush2.msra.mxu0 0.0
        %375 = vmatprep.subr.mxu0 0.0
        %376 = vmatpush2.msra.mxu0 0.0
        %377 = vmatprep.subr.mxu0 0.0
        %378 = vmatpush2.msra.mxu0 0.0
        %379 = vmatprep.subr.mxu0 0.0
        %380 = vmatpush2.msra.mxu0 0.0
        %381 = vmatprep.subr.mxu0 0.0
        %382 = vmatpush2.msra.mxu0 0.0
        %383 = vmatprep.subr.mxu0 0.0
        %384 = vmatpush2.msra.mxu0 0.0
        %385 = vmatprep.mubr.f32.mxu0 0.0
        %386 = vmatmul.mubr.f32.gmra.mxu0 %v201
        %v387 = vpop.f32.mrf.mxu0
        %v388 = vadd.f32 0.0, %v387
        %v389 = vpop.f32.mrf.mxu0
        %390 = vdwg.mxu0
        %v391 = vlaneseq
        %v392 = vshrl.u32 %v391, 7
        %vm393 = vcmp.lt.s32.totalorder %v392, 0
        %v394 = vsub.s32 0, %v392
        %v395 = vsel %vm393, %v394, %v392
        %v396 = vshrl.u32 %v395, 3
        %v397 = vand.u32 %v395, 7
        %v398 = vsub.s32 0, %v397
        %v399 = vsel %vm393, %v398, %v397
        %vm400 = vcmp.ne.s32.totalorder %v399, 0
        %vm401 = vcmp.lt.s32.totalorder %v399, 0
        %vm402 = vmand %vm401, %vm400
        %v403 = vadd.s32 %v399, 8
        %v404 = vsel %vm402, %v403, %v399
        %vm405 = vcmp.eq.s32.totalorder %v404, 0
        %v406 = vrot.slane %v319, 7
        %v407 = vsel %vm405, 0.0, %v406
        %vm408 = vcmp.eq.s32.totalorder %v404, 7
        %v409 = vrot.slane %v388, 1
        %v410 = vsel %vm408, 0.0, %v409
        %v411 = vadd.f32 %v317, %v407
        %v412 = vadd.f32 %v411, %v410
        %v413 = vld [vmem:[%s2] sm:$0x1]
        %v415 = vlaneseq
        %v416 = vshrl.u32 %v415, 7
        %v417 = vsub.s32 0, %v416
        %v418 = vrot.slane %v413, %v417
        %v420 = vadd.f32 %v412, %v418
        %v421 = vmax.f32 %v420, 0.0
        %422 = vst [vmem:[%s200] sm:$0xff] %v421
        %s423 = sand.u32 %s97, 1
        %s424 = scalar_lea.sflag [#allocation4], %s423
        %s425 = sand.u32 %s97, 1
        %s426 = smul.addr %s425, 8
        %s427 = scalar_lea.vmem [#allocation7], %s426
        // Predicated region
        $region41: #{tpu_custom_call.1} parent=31 // pred_check
          %p428 = pneg %p107
        $region42: #{tpu_custom_call.1} parent=31 // pred_check_branch
          %430 = sbr.rel (%p428) target = $region44
        $region43: #{tpu_custom_call.1} parent=31 // pred_region
          %s432 = ssub.s32 128, 128
          %433 = vsyncadd %s424, %s432
          %s434 = smul.addr %s21, 128
          %s435 = scalar_lea.hbm %s3, %s434
          %s437 = sshll.u32 %s427, 4
          %s438 = int_to_ptr.vmem [resolvable:$true] %s437
          %440 = dma.vmem_to_hbm [thread:$0]  %s438, 128, %s435, %s424
        $region44: #{tpu_custom_call.1} parent=31 // pred_fallthru
          _
      $region32: #{tpu_custom_call.1} parent=5 // pred_fallthru
        _
      %p441 = scmp.le.s32.totalorder 2, %s16
      // Predicated region
      $region45: #{tpu_custom_call.1} parent=5 // pred_check
        %p442 = pneg %p441
      $region46: #{tpu_custom_call.1} parent=5 // pred_check_branch
        %444 = sbr.rel (%p442) target = $region48
      $region47: #{tpu_custom_call.1} parent=5 // pred_region
        %s445 = ssub.s32 %s16, 2
        // Predicated region
        $region49: #{tpu_custom_call.1} parent=47 // pred_check
          %p446 = pneg %p113
        $region50: #{tpu_custom_call.1} parent=47 // pred_check_branch
          %448 = sbr.rel (%p446) target = $region52
        $region51: #{tpu_custom_call.1} parent=47 // pred_region
          %s449 = sand.u32 %s98, 1
          %s450 = scalar_lea.sflag [#allocation4], %s449
          %s451 = sand.u32 %s98, 1
          %s452 = smul.addr %s451, 8
          %s453 = scalar_lea.vmem [#allocation7], %s452
          %454 = dma.done %s450, 128
        $region52: #{tpu_custom_call.1} parent=47 // pred_fallthru
          _
      $region48: #{tpu_custom_call.1} parent=5 // pred_fallthru
        _
    $region6: #{tpu_custom_call.1} parent=1 // loop_footer
      %s20 = sadd.s32 1, %s16
    $region7: #{tpu_custom_call.1} parent=1 // loop_footer_branch
      %15 = sbr.rel target = $region3
    $region8: #{tpu_custom_call.1} parent=1 // loop_exit
      _
    %455 = vsyncpa [#allocation3], 1
    %s456 = scalar_lea.sflag [#allocation3], 1
    %457 = vsyncpa %s456, 1
    %458 = vsyncpa [#allocation6], 1
    %459 = vsyncpa [#allocation4], 1
    %s460 = scalar_lea.sflag [#allocation4], 1
    %461 = vsyncpa %s460, 1

</llo_original>
